<compile_context>
chip_gen: v7x
topology: tpu7x:2x2x1
jax: 0.10.0
libtpu: 0.0.40
codegen_flags: <defaults>
</compile_context>

<pallas_src>
import math

import jax
import jax.numpy as jnp
from jax.experimental import pallas as pl
from jax.experimental.pallas import tpu as pltpu

_LANES = 128
_SUBLANES = 8
_MAX_TILE_ROWS = 8192   # up to 4 MiB f32 per input block (8 MiB HBM traffic / step)
_FOLD_ROWS = 256        # rows per inner accumulation step (bounds VMEM temporaries)


def _iou_kernel(pred_ref, targ_ref, inter_ref, sum_ref):
    """Accumulate per-(split, batch) partial sums of p*t and p+t.

    pred_ref / targ_ref: (1, tile_rows, 128) blocks of the flattened input.
    inter_ref / sum_ref: (1, 1, 8, 128) resident output blocks (same block for
    every chunk of a given (split, batch) pair -> accumulate across chunks).
    """
    c = pl.program_id(2)

    @pl.when(c == 0)
    def _():
        inter_ref[...] = jnp.zeros_like(inter_ref)
        sum_ref[...] = jnp.zeros_like(sum_ref)

    tile_rows = pred_ref.shape[1]
    fold = min(_FOLD_ROWS, tile_rows)
    n_groups = tile_rows // fold
    rem = tile_rows - n_groups * fold

    def accum(start, nrows):
        # Read a bounded (nrows, 128) slice; upcast on the VPU (free under DMA).
        p = pred_ref[0, pl.ds(start, nrows), :].astype(jnp.float32)
        t = targ_ref[0, pl.ds(start, nrows), :].astype(jnp.float32)
        nf = nrows // _SUBLANES
        # Fold (nrows,128) -> (8,128): vreg-wise adds only (no XLU work here).
        inter_ref[0, 0] += jnp.sum((p * t).reshape(nf, _SUBLANES, _LANES), axis=0)
        sum_ref[0, 0] += jnp.sum((p + t).reshape(nf, _SUBLANES, _LANES), axis=0)

    if n_groups > 1:
        @pl.loop(0, n_groups)
        def _(g):
            accum(pl.multiple_of(g * fold, fold), fold)
    else:
        accum(0, fold)
    if rem:
        accum(n_groups * fold, rem)


def iou_loss(pred, target, *, max_tile_rows=_MAX_TILE_ROWS):
    """Pallas implementation of IOULoss.forward(pred, target) -> scalar."""
    if target.ndim == 3:
        # mirrors: target = target.view(B, 1, H, W)
        target = target.reshape(target.shape[0], 1, *target.shape[1:])

    # TODO(synk): implicit PyTorch broadcasting of a (B,1,H,W) target against a
    # multi-channel pred (C>1) is not supported; shapes must match after the view.
    assert pred.shape == target.shape, (pred.shape, target.shape)

    B = pred.shape[0]
    n = math.prod(pred.shape[1:])

    item_p = jnp.dtype(pred.dtype).itemsize
    item_t = jnp.dtype(target.dtype).itemsize
    # Sub-32-bit dtypes pack along sublanes: keep row granularity at a packed
    # vreg boundary so dynamic row slices stay aligned.
    sub = max(_SUBLANES, 32 // min(item_p, item_t))

    # ---- tiling: minimal padding, lane-dense blocks -------------------------
    rows = pl.cdiv(n, _LANES)                      # 128-lane rows of real data
    rows_a = pl.cdiv(rows, sub) * sub              # sublane-aligned row count

    # Cap tile so double-buffered inputs stay within a v7x-safe VMEM budget.
    bytes_per_row = _LANES * (item_p + item_t)
    vmem_cap_rows = ((40 << 20) // (2 * bytes_per_row)) // sub * sub
    tile_cap = max(sub, min((int(max_tile_rows) // sub) * sub, vmem_cap_rows))

    # 2-way chunk split (leading "parallel" grid axis) so v7x's two TensorCores
    # both get work when B is 1 or odd; no-op cost on single-TC v5e/v6e.
    n_splits = 2 if (B % 2 == 1) else 1

    n_chunks = max(n_splits, pl.cdiv(rows_a, tile_cap))
    n_chunks = pl.cdiv(n_chunks, n_splits) * n_splits
    tile_rows = pl.cdiv(rows_a, n_chunks * sub) * sub   # pad < sub*n_chunks rows
    rows_padded = tile_rows * n_chunks
    n_padded = rows_padded * _LANES
    cps = n_chunks // n_splits                           # chunks per split

    def _prep(x):
        # Flatten each batch element.  Zero padding (additive identity for both
        # sums) only when the lane-dense reshape needs it; otherwise this is a
        # free layout-preserving reshape (no HBM copy).  No dtype cast here:
        # 16-bit inputs stream at half the HBM traffic and are upcast in-kernel.
        x = x.reshape(B, n)
        if n_padded != n:
            x = jnp.pad(x, ((0, 0), (0, n_padded - n)))
        return x.reshape(B, rows_padded, _LANES)

    p = _prep(pred)
    t = _prep(target)

    # VMEM budget: double-buffered input blocks + headroom for fold temporaries
    # and the tiny output blocks; clamp so the config also fits v7x (64 MiB).
    in_block_bytes = tile_rows * _LANES * (item_p + item_t)
    vmem_limit = int(min(48 << 20, max(16 << 20, 2 * in_block_bytes + (8 << 20))))

    inter_out, sum_out = pl.pallas_call(
        _iou_kernel,
        out_shape=(
            jax.ShapeDtypeStruct((n_splits, B, _SUBLANES, _LANES), jnp.float32),
            jax.ShapeDtypeStruct((n_splits, B, _SUBLANES, _LANES), jnp.float32),
        ),
        grid_spec=pltpu.PrefetchScalarGridSpec(
            num_scalar_prefetch=0,
            grid=(n_splits, B, cps),
            in_specs=[
                pl.BlockSpec((1, tile_rows, _LANES),
                             lambda s, b, c: (b, s * cps + c, 0)),
                pl.BlockSpec((1, tile_rows, _LANES),
                             lambda s, b, c: (b, s * cps + c, 0)),
            ],
            out_specs=[
                pl.BlockSpec((1, 1, _SUBLANES, _LANES),
                             lambda s, b, c: (s, b, 0, 0)),
                pl.BlockSpec((1, 1, _SUBLANES, _LANES),
                             lambda s, b, c: (s, b, 0, 0)),
            ],
        ),
        compiler_params=pltpu.CompilerParams(
            # split axis and batch axis are independent; chunk axis is a reduction.
            dimension_semantics=("parallel", "parallel", "arbitrary"),
            vmem_limit_bytes=vmem_limit,
        ),
    )(p, t)

    # Final cross-lane reduce / divide / mean in plain JAX (negligible cost).
    inter = jnp.sum(inter_out, axis=(0, 2, 3))             # (B,)  sum(p*t)
    union = jnp.sum(sum_out, axis=(0, 2, 3)) - inter       # (B,)  sum(p)+sum(t)-I
    # Note: union == 0 gives NaN/Inf, matching the PyTorch reference behavior.
    return jnp.mean(jnp.float32(1.0) - inter / union)


def _iou_ref(pred, target):
    """Pure-JAX reference matching the PyTorch _iou exactly."""
    if target.ndim == 3:
        target = target.reshape(target.shape[0], 1, *target.shape[1:])
    b = pred.shape[0]
    iou = 0.0
    for i in range(b):
        ti = target[i].astype(jnp.float32)
        pi = pred[i].astype(jnp.float32)
        iand = jnp.sum(ti * pi)
        ior = jnp.sum(ti) + jnp.sum(pi) - iand
        iou = iou + (1.0 - iand / ior)
    return iou / b


if __name__ == "__main__":
    key = jax.random.PRNGKey(0)
    keys = jax.random.split(key, 12)

    # Case 1: common call site — single-channel pred, 3-D binary mask target.
    pred1 = jax.nn.sigmoid(jax.random.normal(keys[0], (2, 1, 16, 16), dtype=jnp.float32))
    targ1 = (jax.random.uniform(keys[1], (2, 16, 16)) > 0.5).astype(jnp.float32)

    # Case 2: multi-channel pred with matching 4-D target.
    pred2 = jax.nn.sigmoid(jax.random.normal(keys[2], (2, 4, 16, 16), dtype=jnp.float32))
    targ2 = (jax.random.uniform(keys[3], (2, 4, 16, 16)) > 0.5).astype(jnp.float32)

    # Case 3: pixel count not a multiple of 128 + forced tiny tile -> exercises
    # the padding path and multi-chunk accumulation.
    pred3 = jax.nn.sigmoid(jax.random.normal(keys[4], (2, 1, 40, 40), dtype=jnp.float32))
    targ3 = (jax.random.uniform(keys[5], (2, 40, 40)) > 0.5).astype(jnp.float32)

    # Case 4: B == 1 -> exercises the 2-way chunk split (dual-TC path on v7x).
    pred4 = jax.nn.sigmoid(jax.random.normal(keys[6], (1, 1, 40, 40), dtype=jnp.float32))
    targ4 = (jax.random.uniform(keys[7], (1, 40, 40)) > 0.5).astype(jnp.float32)

    # Case 5: odd B > 1 -> chunk split combined with several batch elements.
    pred5 = jax.nn.sigmoid(jax.random.normal(keys[8], (3, 1, 24, 24), dtype=jnp.float32))
    targ5 = (jax.random.uniform(keys[9], (3, 24, 24)) > 0.5).astype(jnp.float32)

    # Case 6: bf16 pred streamed in its native dtype (upcast happens on the VPU).
    pred6 = jax.nn.sigmoid(jax.random.normal(keys[10], (2, 1, 16, 16))).astype(jnp.bfloat16)
    targ6 = (jax.random.uniform(keys[11], (2, 16, 16)) > 0.5).astype(jnp.float32)

    cases = [
        (pred1, targ1, _MAX_TILE_ROWS),
        (pred2, targ2, _MAX_TILE_ROWS),
        (pred3, targ3, 8),
        (pred4, targ4, 8),
        (pred5, targ5, _MAX_TILE_ROWS),
        (pred6, targ6, _MAX_TILE_ROWS),
    ]
    for pred, targ, mtr in cases:
        loss = iou_loss(pred, targ, max_tile_rows=mtr)
        jax.block_until_ready(loss)
        ref = _iou_ref(pred, targ)
        assert jnp.allclose(loss, ref, rtol=1e-5, atol=1e-6), (loss, ref)

    print("KERNEL_OK")
</pallas_src>

<mosaic_0001>
module attributes {stable_mosaic.version = 11 : i64} {
  func.func @_iou_kernel(%arg0: i32, %arg1: i32, %arg2: i32, %arg3: memref<1x8x128xf32, #tpu.memory_space<vmem>>, %arg4: memref<1x8x128xf32, #tpu.memory_space<vmem>>, %arg5: memref<1x1x8x128xf32, #tpu.memory_space<vmem>>, %arg6: memref<1x1x8x128xf32, #tpu.memory_space<vmem>>) attributes {dimension_semantics = [#tpu.dimension_semantics<parallel>, #tpu.dimension_semantics<parallel>, #tpu.dimension_semantics<arbitrary>], iteration_bounds = array<i64: 1, 2, 1>, scalar_prefetch = 0 : i64, scratch_operands = 0 : i64, tpu.core_type = #tpu.core_type<tc>, window_params = [{transform_indices = @transform_0, window_bounds = array<i64: 1, 8, 128>}, {transform_indices = @transform_1, window_bounds = array<i64: 1, 8, 128>}, {transform_indices = @transform_2, window_bounds = array<i64: 1, 1, 8, 128>}, {transform_indices = @transform_3, window_bounds = array<i64: 1, 1, 8, 128>}]} {
    %c0_i32 = arith.constant 0 : i32
    %0 = arith.cmpi eq, %arg2, %c0_i32 : i32
    %1 = arith.extui %0 : i1 to i32
    %c0_i32_0 = arith.constant 0 : i32
    %2 = arith.cmpi ne, %1, %c0_i32_0 : i32
    scf.if %2 {
      %cst_23 = arith.constant 0.000000e+00 : f32
      %25 = vector.broadcast %cst_23 : f32 to vector<1x1x8x128xf32>
      %c0_24 = arith.constant 0 : index
      %c0_25 = arith.constant 0 : index
      %c0_26 = arith.constant 0 : index
      %c0_27 = arith.constant 0 : index
      %26 = vector.load %arg5[%c0_24, %c0_25, %c0_26, %c0_27] : memref<1x1x8x128xf32, #tpu.memory_space<vmem>>, vector<1x1x8x128xf32>
      tpu.vector_store %arg5[%c0_24, %c0_25, %c0_26, %c0_27], %25 {strides = array<i32>} : memref<1x1x8x128xf32, #tpu.memory_space<vmem>>, vector<1x1x8x128xf32>,
      %cst_28 = arith.constant 0.000000e+00 : f32
      %27 = vector.broadcast %cst_28 : f32 to vector<1x1x8x128xf32>
      %c0_29 = arith.constant 0 : index
      %c0_30 = arith.constant 0 : index
      %c0_31 = arith.constant 0 : index
      %c0_32 = arith.constant 0 : index
      %28 = vector.load %arg6[%c0_29, %c0_30, %c0_31, %c0_32] : memref<1x1x8x128xf32, #tpu.memory_space<vmem>>, vector<1x1x8x128xf32>
      tpu.vector_store %arg6[%c0_29, %c0_30, %c0_31, %c0_32], %27 {strides = array<i32>} : memref<1x1x8x128xf32, #tpu.memory_space<vmem>>, vector<1x1x8x128xf32>,
    } else {
    }
    %c0 = arith.constant 0 : index
    %c0_1 = arith.constant 0 : index
    %c0_2 = arith.constant 0 : index
    %3 = vector.load %arg3[%c0, %c0_1, %c0_2] : memref<1x8x128xf32, #tpu.memory_space<vmem>>, vector<1x8x128xf32>
    %4 = vector.shape_cast %3 : vector<1x8x128xf32> to vector<8x128xf32>
    %c0_3 = arith.constant 0 : index
    %c0_4 = arith.constant 0 : index
    %c0_5 = arith.constant 0 : index
    %5 = vector.load %arg4[%c0_3, %c0_4, %c0_5] : memref<1x8x128xf32, #tpu.memory_space<vmem>>, vector<1x8x128xf32>
    %6 = vector.shape_cast %5 : vector<1x8x128xf32> to vector<8x128xf32>
    %c0_6 = arith.constant 0 : index
    %c0_7 = arith.constant 0 : index
    %c0_8 = arith.constant 0 : index
    %c0_9 = arith.constant 0 : index
    %7 = vector.load %arg5[%c0_6, %c0_7, %c0_8, %c0_9] : memref<1x1x8x128xf32, #tpu.memory_space<vmem>>, vector<1x1x8x128xf32>
    %8 = vector.shape_cast %7 : vector<1x1x8x128xf32> to vector<8x128xf32>
    %9 = arith.mulf %4, %6 : vector<8x128xf32>
    %10 = vector.shape_cast %9 : vector<8x128xf32> to vector<1x8x128xf32>
    %cst = arith.constant dense<0.000000e+00> : vector<8x128xf32>
    %11 = vector.multi_reduction <add>, %10, %cst [0] : vector<1x8x128xf32> to vector<8x128xf32>
    %12 = arith.addf %8, %11 : vector<8x128xf32>
    %c0_10 = arith.constant 0 : index
    %c0_11 = arith.constant 0 : index
    %c0_12 = arith.constant 0 : index
    %c0_13 = arith.constant 0 : index
    %13 = vector.load %arg5[%c0_10, %c0_11, %c0_12, %c0_13] : memref<1x1x8x128xf32, #tpu.memory_space<vmem>>, vector<1x1x8x128xf32>
    %14 = vector.shape_cast %13 : vector<1x1x8x128xf32> to vector<8x128xf32>
    %15 = vector.shape_cast %12 : vector<8x128xf32> to vector<1x1x8x128xf32>
    tpu.vector_store %arg5[%c0_10, %c0_11, %c0_12, %c0_13], %15 {strides = array<i32>} : memref<1x1x8x128xf32, #tpu.memory_space<vmem>>, vector<1x1x8x128xf32>,
    %c0_14 = arith.constant 0 : index
    %c0_15 = arith.constant 0 : index
    %c0_16 = arith.constant 0 : index
    %c0_17 = arith.constant 0 : index
    %16 = vector.load %arg6[%c0_14, %c0_15, %c0_16, %c0_17] : memref<1x1x8x128xf32, #tpu.memory_space<vmem>>, vector<1x1x8x128xf32>
    %17 = vector.shape_cast %16 : vector<1x1x8x128xf32> to vector<8x128xf32>
    %18 = arith.addf %4, %6 : vector<8x128xf32>
    %19 = vector.shape_cast %18 : vector<8x128xf32> to vector<1x8x128xf32>
    %cst_18 = arith.constant dense<0.000000e+00> : vector<8x128xf32>
    %20 = vector.multi_reduction <add>, %19, %cst_18 [0] : vector<1x8x128xf32> to vector<8x128xf32>
    %21 = arith.addf %17, %20 : vector<8x128xf32>
    %c0_19 = arith.constant 0 : index
    %c0_20 = arith.constant 0 : index
    %c0_21 = arith.constant 0 : index
    %c0_22 = arith.constant 0 : index
    %22 = vector.load %arg6[%c0_19, %c0_20, %c0_21, %c0_22] : memref<1x1x8x128xf32, #tpu.memory_space<vmem>>, vector<1x1x8x128xf32>
    %23 = vector.shape_cast %22 : vector<1x1x8x128xf32> to vector<8x128xf32>
    %24 = vector.shape_cast %21 : vector<8x128xf32> to vector<1x1x8x128xf32>
    tpu.vector_store %arg6[%c0_19, %c0_20, %c0_21, %c0_22], %24 {strides = array<i32>} : memref<1x1x8x128xf32, #tpu.memory_space<vmem>>, vector<1x1x8x128xf32>,
    return
  }
  func.func @transform_0(%arg0: i32, %arg1: i32, %arg2: i32) -> (i32, i32, i32) {
    %c1_i32 = arith.constant 1 : i32
    %0 = arith.muli %arg0, %c1_i32 : i32
    %1 = arith.addi %0, %arg2 : i32
    %c0_i32 = arith.constant 0 : i32
    %c0_i32_0 = arith.constant 0 : i32
    return %arg1, %1, %c0_i32 : i32, i32, i32
  }
  func.func @transform_1(%arg0: i32, %arg1: i32, %arg2: i32) -> (i32, i32, i32) {
    %c1_i32 = arith.constant 1 : i32
    %0 = arith.muli %arg0, %c1_i32 : i32
    %1 = arith.addi %0, %arg2 : i32
    %c0_i32 = arith.constant 0 : i32
    %c0_i32_0 = arith.constant 0 : i32
    return %arg1, %1, %c0_i32 : i32, i32, i32
  }
  func.func @transform_2(%arg0: i32, %arg1: i32, %arg2: i32) -> (i32, i32, i32, i32) {
    %c0_i32 = arith.constant 0 : i32
    %c0_i32_0 = arith.constant 0 : i32
    %c0_i32_1 = arith.constant 0 : i32
    return %arg0, %arg1, %c0_i32, %c0_i32_0 : i32, i32, i32, i32
  }
  func.func @transform_3(%arg0: i32, %arg1: i32, %arg2: i32) -> (i32, i32, i32, i32) {
    %c0_i32 = arith.constant 0 : i32
    %c0_i32_0 = arith.constant 0 : i32
    %c0_i32_1 = arith.constant 0 : i32
    return %arg0, %arg1, %c0_i32, %c0_i32_0 : i32, i32, i32, i32
  }
}

</mosaic_0001>

<llo_original>
// kernel: tpu_custom_call.1
$region0: #{tpu_custom_call.1}
  #allocation0 [shape = 'u32[]', space=smem, size = 0x4, offset = 0x4, fixed_abs, tag = 'smem constant byte address 0x4 - core index']
  #allocation1 [shape = 'u32[144,128]{1,0:T(1,128)}', space=vmem, size = 0x12000, scoped, tag = 'internal scratch']
  %s0 = inlined_call_operand.hbm [shape: f32[2,8,128], index: 0, kind: input, shape index: {}]
  %s1 = inlined_call_operand.hbm [shape: f32[2,8,128], index: 1, kind: input, shape index: {}]
  %s2 = inlined_call_operand.hbm [shape: f32[1,2,8,128], index: 2, kind: output, shape index: {0}]
  %s3 = inlined_call_operand.hbm [shape: f32[1,2,8,128], index: 3, kind: output, shape index: {1}]
  %4 = xla_tuple %s2, %s3
  %s5 = sld [smem:[#allocation0]]
  $region61: #{tpu_custom_call.1} parent=0
    _
  %s7 = ssub.s32 1, %s5
  %s8 = scalar_select 0, %s7, %s5
  $region1: #{tpu_custom_call.1} parent=0
    #allocation2 [shape = 'u8[8192]{0}', space=vmem, size = 0x2000, scoped, tag = 'input window, operand 0']
    #allocation3 [shape = 's32[2]{0}', space=sflag, size = 0x8, scoped, tag = 'scoped memory for tpu_custom_call.1']
    #allocation4 [shape = 's32[2]{0}', space=sflag, size = 0x8, scoped, tag = 'scoped memory for tpu_custom_call.1']
    #allocation5 [shape = 'u8[8192]{0}', space=vmem, size = 0x2000, scoped, tag = 'input window, operand 1']
    #allocation6 [shape = 's32[2]{0}', space=sflag, size = 0x8, scoped, tag = 'scoped memory for tpu_custom_call.1']
    #allocation7 [shape = 'u8[8192]{0}', space=vmem, size = 0x2000, scoped, tag = 'output window, operand 0']
    #allocation8 [shape = 'u8[8192]{0}', space=vmem, size = 0x2000, scoped, tag = 'output window, operand 1']
    #allocation9 [shape = 's32[2]{0}', space=sflag, size = 0x8, scoped, tag = 'scoped memory for tpu_custom_call.1']
    %9 = vsyncpa [#allocation3], 0
    %s10 = scalar_lea.sflag [#allocation3], 1
    %11 = vsyncpa %s10, 0
    %12 = vsyncpa [#allocation6], 0
    %s13 = scalar_lea.sflag [#allocation6], 1
    %14 = vsyncpa %s13, 0
    %15 = vsyncpa [#allocation4], 0
    %s16 = scalar_lea.sflag [#allocation4], 1
    %17 = vsyncpa %s16, 0
    %18 = vsyncpa [#allocation9], 0
    %s19 = scalar_lea.sflag [#allocation9], 1
    %20 = vsyncpa %s19, 0
    loop: start=0, step=1, limit=4
    $region2: #{tpu_custom_call.1} parent=1 // loop_pre_header
      _
    $region3: #{tpu_custom_call.1} parent=1 // loop_header
      %s22 = sphi 0, %s26
      %p23 = scmp.ge.s32.totalorder %s22, 4
      %s29 = sphi 0, %s48
      %s30 = sphi 0, %s44
      %s31 = sphi 0, %s40
      %s32 = sphi 0, %s29
      %s33 = sphi 0, %s30
      %s34 = sphi 0, %s31
      %s35 = sphi 0, %s32
      %s36 = sphi 0, %s33
      %s37 = sphi 0, %s34
      %s55 = sphi 0, %s57
      %s58 = sphi 0, %s55
      %s59 = sphi 0, %s58
      %s75 = sphi 0, %s59
      %s85 = sphi 0, %s87
      %s88 = sphi 0, %s85
      %s89 = sphi 0, %s88
      %s105 = sphi 0, %s89
      %s113 = sphi 0, %s115
      %s116 = sphi 0, %s113
      %s117 = sphi 0, %s116
      %s133 = sphi 0, %s117
      %s141 = sphi 0, %s143
      %s144 = sphi 0, %s141
      %s145 = sphi 0, %s144
      %s161 = sphi 0, %s145
    $region4: #{tpu_custom_call.1} parent=1 // loop_header_branch
      %25 = sbr.rel (%p23) target = $region8
    $region5: #{tpu_custom_call.1} parent=1 // loop_body
      %s27 = ssub.s32 %s22, 1
      %s28 = ssub.s32 %s22, 2
      %s38 = sadd.s32 1, %s31
      %p39 = scmp.ge.s32.totalorder %s38, 1
      %s40 = scalar_select %p39, 0, %s38
      %s41 = sadd.s32 1, %s30
      %s42 = scalar_select %p39, %s41, %s30
      %p43 = scmp.ge.s32.totalorder %s42, 2
      %s44 = scalar_select %p43, 0, %s42
      %s45 = sadd.s32 1, %s29
      %s46 = scalar_select %p43, %s45, %s29
      %p47 = scmp.ge.s32.totalorder %s46, 1
      %s48 = scalar_select %p47, 0, %s46
      %s49 = sadd.s32 %s29, %s31
      %s50 = sadd.s32 %s48, %s40
      %s51 = ssub.s32 %s30, %s44
      %s52 = ssub.s32 %s49, %s50
      %s53 = sor.u32 %s51, %s52
      %p54 = scmp.eq.s32.totalorder %s53, 0
      %s56 = sadd.s32 %s55, 1
      %s57 = scalar_select %p54, %s55, %s56
      %p60 = pneg %p54
      %p61 = scmp.eq.s32.totalorder %s22, 1
      %p62 = por %p60, %p61
      %p63 = scmp.ne.s32.totalorder %s55, %s58
      %p64 = scmp.eq.s32.totalorder %s22, 0
      %p65 = por %p63, %p64
      %p66 = scmp.ne.s32.totalorder %s55, %s58
      %p67 = scmp.eq.s32.totalorder %s27, 1
      %p68 = por %p66, %p67
      %p69 = scmp.ne.s32.totalorder %s58, %s59
      %p70 = scmp.eq.s32.totalorder %s27, 0
      %p71 = por %p69, %p70
      %p72 = scmp.ne.s32.totalorder %s58, %s59
      %p73 = scmp.eq.s32.totalorder %s28, 1
      %p74 = por %p72, %p73
      %p76 = scmp.ne.s32.totalorder %s59, %s75
      %p77 = scmp.eq.s32.totalorder %s28, 0
      %p78 = por %p76, %p77
      %s79 = sadd.s32 %s29, %s31
      %s80 = sadd.s32 %s48, %s40
      %s81 = ssub.s32 %s30, %s44
      %s82 = ssub.s32 %s79, %s80
      %s83 = sor.u32 %s81, %s82
      %p84 = scmp.eq.s32.totalorder %s83, 0
      %s86 = sadd.s32 %s85, 1
      %s87 = scalar_select %p84, %s85, %s86
      %p90 = pneg %p84
      %p91 = scmp.eq.s32.totalorder %s22, 1
      %p92 = por %p90, %p91
      %p93 = scmp.ne.s32.totalorder %s85, %s88
      %p94 = scmp.eq.s32.totalorder %s22, 0
      %p95 = por %p93, %p94
      %p96 = scmp.ne.s32.totalorder %s85, %s88
      %p97 = scmp.eq.s32.totalorder %s27, 1
      %p98 = por %p96, %p97
      %p99 = scmp.ne.s32.totalorder %s88, %s89
      %p100 = scmp.eq.s32.totalorder %s27, 0
      %p101 = por %p99, %p100
      %p102 = scmp.ne.s32.totalorder %s88, %s89
      %p103 = scmp.eq.s32.totalorder %s28, 1
      %p104 = por %p102, %p103
      %p106 = scmp.ne.s32.totalorder %s89, %s105
      %p107 = scmp.eq.s32.totalorder %s28, 0
      %p108 = por %p106, %p107
      %s109 = ssub.s32 %s29, %s48
      %s110 = ssub.s32 %s30, %s44
      %s111 = sor.u32 %s109, %s110
      %p112 = scmp.eq.s32.totalorder %s111, 0
      %s114 = sadd.s32 %s113, 1
      %s115 = scalar_select %p112, %s113, %s114
      %p118 = pneg %p112
      %p119 = scmp.eq.s32.totalorder %s22, 1
      %p120 = por %p118, %p119
      %p121 = scmp.ne.s32.totalorder %s113, %s116
      %p122 = scmp.eq.s32.totalorder %s22, 0
      %p123 = por %p121, %p122
      %p124 = scmp.ne.s32.totalorder %s113, %s116
      %p125 = scmp.eq.s32.totalorder %s27, 1
      %p126 = por %p124, %p125
      %p127 = scmp.ne.s32.totalorder %s116, %s117
      %p128 = scmp.eq.s32.totalorder %s27, 0
      %p129 = por %p127, %p128
      %p130 = scmp.ne.s32.totalorder %s116, %s117
      %p131 = scmp.eq.s32.totalorder %s28, 1
      %p132 = por %p130, %p131
      %p134 = scmp.ne.s32.totalorder %s117, %s133
      %p135 = scmp.eq.s32.totalorder %s28, 0
      %p136 = por %p134, %p135
      %s137 = ssub.s32 %s29, %s48
      %s138 = ssub.s32 %s30, %s44
      %s139 = sor.u32 %s137, %s138
      %p140 = scmp.eq.s32.totalorder %s139, 0
      %s142 = sadd.s32 %s141, 1
      %s143 = scalar_select %p140, %s141, %s142
      %p146 = pneg %p140
      %p147 = scmp.eq.s32.totalorder %s22, 1
      %p148 = por %p146, %p147
      %p149 = scmp.ne.s32.totalorder %s141, %s144
      %p150 = scmp.eq.s32.totalorder %s22, 0
      %p151 = por %p149, %p150
      %p152 = scmp.ne.s32.totalorder %s141, %s144
      %p153 = scmp.eq.s32.totalorder %s27, 1
      %p154 = por %p152, %p153
      %p155 = scmp.ne.s32.totalorder %s144, %s145
      %p156 = scmp.eq.s32.totalorder %s27, 0
      %p157 = por %p155, %p156
      %p158 = scmp.ne.s32.totalorder %s144, %s145
      %p159 = scmp.eq.s32.totalorder %s28, 1
      %p160 = por %p158, %p159
      %p162 = scmp.ne.s32.totalorder %s145, %s161
      %p163 = scmp.eq.s32.totalorder %s28, 0
      %p164 = por %p162, %p163
      %p165 = scmp.le.s32.totalorder 1, %s22
      %p166 = scmp.lt.s32.totalorder %s22, 3
      %p167 = pnand %p165, %p166
      %p168 = pneg %p167
      // Predicated region
      $region9: #{tpu_custom_call.1} parent=5 // pred_check
        _
      $region10: #{tpu_custom_call.1} parent=5 // pred_check_branch
        %170 = sbr.rel (%p167) target = $region12
      $region11: #{tpu_custom_call.1} parent=5 // pred_region
        %s171 = ssub.s32 %s22, 1
      $region12: #{tpu_custom_call.1} parent=5 // pred_fallthru
        _
      %p172 = scmp.lt.s32.totalorder %s22, 2
      // Predicated region
      $region13: #{tpu_custom_call.1} parent=5 // pred_check
        %p173 = pneg %p172
      $region14: #{tpu_custom_call.1} parent=5 // pred_check_branch
        %175 = sbr.rel (%p173) target = $region16
      $region15: #{tpu_custom_call.1} parent=5 // pred_region
        // Predicated region
        $region17: #{tpu_custom_call.1} parent=15 // pred_check
          %p176 = pneg %p65
        $region18: #{tpu_custom_call.1} parent=15 // pred_check_branch
          %178 = sbr.rel (%p176) target = $region20
        $region19: #{tpu_custom_call.1} parent=15 // pred_region
          %s179 = sand.u32 %s55, 1
          %s180 = scalar_lea.sflag [#allocation3], %s179
          %s181 = sand.u32 %s55, 1
          %s182 = smul.addr %s181, 8
          %s183 = scalar_lea.vmem [#allocation2], %s182
          %s184 = sadd.s32 %s29, %s31
          %s186 = ssub.s32 128, 128
          %187 = vsyncadd %s180, %s186
          %s188 = sadd.s32 %s184, %s30
          %s189 = smul.addr %s188, 128
          %s190 = scalar_lea.hbm %s0, %s189
          %s192 = sshll.u32 %s183, 4
          %s193 = int_to_ptr.vmem [resolvable:$true] %s192
          %195 = dma.hbm_to_vmem [thread:$0]  %s190, 128, %s193, %s180
        $region20: #{tpu_custom_call.1} parent=15 // pred_fallthru
          _
        // Predicated region
        $region21: #{tpu_custom_call.1} parent=15 // pred_check
          %p196 = pneg %p95
        $region22: #{tpu_custom_call.1} parent=15 // pred_check_branch
          %198 = sbr.rel (%p196) target = $region24
        $region23: #{tpu_custom_call.1} parent=15 // pred_region
          %s199 = sand.u32 %s85, 1
          %s200 = scalar_lea.sflag [#allocation6], %s199
          %s201 = sand.u32 %s85, 1
          %s202 = smul.addr %s201, 8
          %s203 = scalar_lea.vmem [#allocation5], %s202
          %s204 = sadd.s32 %s29, %s31
          %s206 = ssub.s32 128, 128
          %207 = vsyncadd %s200, %s206
          %s208 = sadd.s32 %s204, %s30
          %s209 = smul.addr %s208, 128
          %s210 = scalar_lea.hbm %s1, %s209
          %s212 = sshll.u32 %s203, 4
          %s213 = int_to_ptr.vmem [resolvable:$true] %s212
          %215 = dma.hbm_to_vmem [thread:$0]  %s210, 128, %s213, %s200
        $region24: #{tpu_custom_call.1} parent=15 // pred_fallthru
          _
      $region16: #{tpu_custom_call.1} parent=5 // pred_fallthru
        _
      %p216 = scmp.le.s32.totalorder 1, %s22
      %p217 = scmp.lt.s32.totalorder %s22, 3
      %p218 = pnand %p216, %p217
      %p219 = pneg %p218
      // Predicated region
      $region25: #{tpu_custom_call.1} parent=5 // pred_check
        _
      $region26: #{tpu_custom_call.1} parent=5 // pred_check_branch
        %221 = sbr.rel (%p218) target = $region28
      $region27: #{tpu_custom_call.1} parent=5 // pred_region
        %s222 = ssub.s32 %s22, 1
        %s223 = sand.u32 %s58, 1
        %s224 = scalar_lea.sflag [#allocation3], %s223
        %s225 = sand.u32 %s58, 1
        %s226 = smul.addr %s225, 8
        %s227 = scalar_lea.vmem [#allocation2], %s226
        // Predicated region
        $region29: #{tpu_custom_call.1} parent=27 // pred_check
          %p228 = pneg %p71
        $region30: #{tpu_custom_call.1} parent=27 // pred_check_branch
          %230 = sbr.rel (%p228) target = $region32
        $region31: #{tpu_custom_call.1} parent=27 // pred_region
          %231 = dma.done %s224, 128
        $region32: #{tpu_custom_call.1} parent=27 // pred_fallthru
          _
        %s232 = sand.u32 %s88, 1
        %s233 = scalar_lea.sflag [#allocation6], %s232
        %s234 = sand.u32 %s88, 1
        %s235 = smul.addr %s234, 8
        %s236 = scalar_lea.vmem [#allocation5], %s235
        // Predicated region
        $region33: #{tpu_custom_call.1} parent=27 // pred_check
          %p237 = pneg %p101
        $region34: #{tpu_custom_call.1} parent=27 // pred_check_branch
          %239 = sbr.rel (%p237) target = $region36
        $region35: #{tpu_custom_call.1} parent=27 // pred_region
          %240 = dma.done %s233, 128
        $region36: #{tpu_custom_call.1} parent=27 // pred_fallthru
          _
        %s241 = sand.u32 %s58, 1
        %s242 = scalar_lea.sflag [#allocation3], %s241
        %s243 = sand.u32 %s58, 1
        %s244 = smul.addr %s243, 8
        %s245 = scalar_lea.vmem [#allocation2], %s244
        %p246 = pneg %p71
        %p247 = pneg %p68
        %s248 = sand.u32 %s88, 1
        %s249 = scalar_lea.sflag [#allocation6], %s248
        %s250 = sand.u32 %s88, 1
        %s251 = smul.addr %s250, 8
        %s252 = scalar_lea.vmem [#allocation5], %s251
        %p253 = pneg %p101
        %p254 = pneg %p98
        %p255 = pneg %p129
        %p256 = pneg %p126
        %s257 = sand.u32 %s116, 1
        %s258 = scalar_lea.sflag [#allocation4], %s257
        %s259 = sand.u32 %s116, 1
        %s260 = smul.addr %s259, 8
        %s261 = scalar_lea.vmem [#allocation7], %s260
        %p262 = pneg %p157
        %p263 = pneg %p154
        %s264 = sand.u32 %s144, 1
        %s265 = scalar_lea.sflag [#allocation9], %s264
        %s266 = sand.u32 %s144, 1
        %s267 = smul.addr %s266, 8
        %s268 = scalar_lea.vmem [#allocation8], %s267
        %s269 = sadd.s32 %s32, %s34
        %s270 = sadd.s32 %s32, %s34
        %p271 = scmp.eq.s32.totalorder %s34, 0
        // Predicated region
        $region37: #{tpu_custom_call.1} parent=27 // pred_check
          %p272 = pneg %p271
        $region38: #{tpu_custom_call.1} parent=27 // pred_check_branch
          %274 = sbr.rel (%p272) target = $region40
        $region39: #{tpu_custom_call.1} parent=27 // pred_region
          %275 = vst [vmem:[%s261] sm:$0xff] 0.0
          %276 = vst [vmem:[%s268] sm:$0xff] 0.0
        $region40: #{tpu_custom_call.1} parent=27 // pred_fallthru
          _
        %v277 = vld [vmem:[%s227] sm:$0xff]
        %v278 = vld [vmem:[%s236] sm:$0xff]
        %v279 = vld [vmem:[%s261] sm:$0xff]
        %v280 = vmul.f32 %v277, %v278
        %v281 = vadd.f32 %v280, 0.0
        %v282 = vadd.f32 %v279, %v281
        %283 = vst [vmem:[%s261] sm:$0xff] %v282
        %v284 = vld [vmem:[%s268] sm:$0xff]
        %v285 = vadd.f32 %v277, %v278
        %v286 = vadd.f32 %v285, 0.0
        %v287 = vadd.f32 %v284, %v286
        %288 = vst [vmem:[%s268] sm:$0xff] %v287
        %s289 = sand.u32 %s116, 1
        %s290 = scalar_lea.sflag [#allocation4], %s289
        %s291 = sand.u32 %s116, 1
        %s292 = smul.addr %s291, 8
        %s293 = scalar_lea.vmem [#allocation7], %s292
        %s294 = sand.u32 %s144, 1
        %s295 = scalar_lea.sflag [#allocation9], %s294
        %s296 = sand.u32 %s144, 1
        %s297 = smul.addr %s296, 8
        %s298 = scalar_lea.vmem [#allocation8], %s297
        // Predicated region
        $region41: #{tpu_custom_call.1} parent=27 // pred_check
          %p299 = pneg %p126
        $region42: #{tpu_custom_call.1} parent=27 // pred_check_branch
          %301 = sbr.rel (%p299) target = $region44
        $region43: #{tpu_custom_call.1} parent=27 // pred_region
          %s303 = ssub.s32 128, 128
          %304 = vsyncadd %s290, %s303
          %s305 = smul.addr %s32, 2
          %s306 = sadd.s32 %s33, %s305
          %s307 = smul.addr %s306, 128
          %s308 = scalar_lea.hbm %s2, %s307
          %s310 = sshll.u32 %s293, 4
          %s311 = int_to_ptr.vmem [resolvable:$true] %s310
          %313 = dma.vmem_to_hbm [thread:$0]  %s311, 128, %s308, %s290
        $region44: #{tpu_custom_call.1} parent=27 // pred_fallthru
          _
        // Predicated region
        $region45: #{tpu_custom_call.1} parent=27 // pred_check
          %p314 = pneg %p154
        $region46: #{tpu_custom_call.1} parent=27 // pred_check_branch
          %316 = sbr.rel (%p314) target = $region48
        $region47: #{tpu_custom_call.1} parent=27 // pred_region
          %s318 = ssub.s32 128, 128
          %319 = vsyncadd %s295, %s318
          %s320 = smul.addr %s32, 2
          %s321 = sadd.s32 %s33, %s320
          %s322 = smul.addr %s321, 128
          %s323 = scalar_lea.hbm %s3, %s322
          %s325 = sshll.u32 %s298, 4
          %s326 = int_to_ptr.vmem [resolvable:$true] %s325
          %328 = dma.vmem_to_hbm [thread:$0]  %s326, 128, %s323, %s295
        $region48: #{tpu_custom_call.1} parent=27 // pred_fallthru
          _
      $region28: #{tpu_custom_call.1} parent=5 // pred_fallthru
        _
      %p329 = scmp.le.s32.totalorder 2, %s22
      // Predicated region
      $region49: #{tpu_custom_call.1} parent=5 // pred_check
        %p330 = pneg %p329
      $region50: #{tpu_custom_call.1} parent=5 // pred_check_branch
        %332 = sbr.rel (%p330) target = $region52
      $region51: #{tpu_custom_call.1} parent=5 // pred_region
        %s333 = ssub.s32 %s22, 2
        // Predicated region
        $region53: #{tpu_custom_call.1} parent=51 // pred_check
          %p334 = pneg %p132
        $region54: #{tpu_custom_call.1} parent=51 // pred_check_branch
          %336 = sbr.rel (%p334) target = $region56
        $region55: #{tpu_custom_call.1} parent=51 // pred_region
          %s337 = sand.u32 %s117, 1
          %s338 = scalar_lea.sflag [#allocation4], %s337
          %s339 = sand.u32 %s117, 1
          %s340 = smul.addr %s339, 8
          %s341 = scalar_lea.vmem [#allocation7], %s340
          %342 = dma.done %s338, 128
        $region56: #{tpu_custom_call.1} parent=51 // pred_fallthru
          _
        // Predicated region
        $region57: #{tpu_custom_call.1} parent=51 // pred_check
          %p343 = pneg %p160
        $region58: #{tpu_custom_call.1} parent=51 // pred_check_branch
          %345 = sbr.rel (%p343) target = $region60
        $region59: #{tpu_custom_call.1} parent=51 // pred_region
          %s346 = sand.u32 %s145, 1
          %s347 = scalar_lea.sflag [#allocation9], %s346
          %s348 = sand.u32 %s145, 1
          %s349 = smul.addr %s348, 8
          %s350 = scalar_lea.vmem [#allocation8], %s349
          %351 = dma.done %s347, 128
        $region60: #{tpu_custom_call.1} parent=51 // pred_fallthru
          _
      $region52: #{tpu_custom_call.1} parent=5 // pred_fallthru
        _
    $region6: #{tpu_custom_call.1} parent=1 // loop_footer
      %s26 = sadd.s32 1, %s22
    $region7: #{tpu_custom_call.1} parent=1 // loop_footer_branch
      %21 = sbr.rel target = $region3
    $region8: #{tpu_custom_call.1} parent=1 // loop_exit
      _
    %352 = vsyncpa [#allocation3], 1
    %s353 = scalar_lea.sflag [#allocation3], 1
    %354 = vsyncpa %s353, 1
    %355 = vsyncpa [#allocation6], 1
    %s356 = scalar_lea.sflag [#allocation6], 1
    %357 = vsyncpa %s356, 1
    %358 = vsyncpa [#allocation4], 1
    %s359 = scalar_lea.sflag [#allocation4], 1
    %360 = vsyncpa %s359, 1
    %361 = vsyncpa [#allocation9], 1
    %s362 = scalar_lea.sflag [#allocation9], 1
    %363 = vsyncpa %s362, 1

</llo_original>
